<compile_context>
chip_gen: v5e
topology: v5e:2x2
jax: 0.10.0
libtpu: 0.0.40
codegen_flags: <defaults>
</compile_context>

<pallas_src>
import functools

import jax
import jax.numpy as jnp
from jax.experimental import pallas as pl
from jax.experimental.pallas import tpu as pltpu


def _layer_norm_store(h, g_ref, bt_ref, o_ref, *, eps):
    # Two-pass LayerNorm over the hidden dim (matches torch.nn.LayerNorm).
    mean = jnp.mean(h, axis=-1, keepdims=True)
    centered = h - mean
    var = jnp.mean(centered * centered, axis=-1, keepdims=True)
    normed = centered * jax.lax.rsqrt(var + eps)
    o_ref[...] = (normed * g_ref[...] + bt_ref[...]).astype(o_ref.dtype)


def _comb_proj_kernel2(x1_ref, x2_ref, w1_ref, w2_ref, b_ref, g_ref, bt_ref,
                       o_ref, *, eps):
    # Two-input path (cate + cont): the concat is fused into a split matmul.
    x1 = jnp.maximum(x1_ref[...], 0.0)                    # nn.ReLU()
    x2 = jnp.maximum(x2_ref[...], 0.0)
    h = jnp.dot(x1, w1_ref[...], preferred_element_type=jnp.float32)
    h = h + jnp.dot(x2, w2_ref[...], preferred_element_type=jnp.float32)
    h = h + b_ref[...]                                    # nn.Linear bias
    _layer_norm_store(h, g_ref, bt_ref, o_ref, eps=eps)


def _comb_proj_kernel1(x_ref, w_ref, b_ref, g_ref, bt_ref, o_ref, *, eps):
    # Single-input path (only cate or only cont present).
    x = jnp.maximum(x_ref[...], 0.0)
    h = jnp.dot(x, w_ref[...], preferred_element_type=jnp.float32)
    h = h + b_ref[...]
    _layer_norm_store(h, g_ref, bt_ref, o_ref, eps=eps)


def _round_up(x, m):
    return (x + m - 1) // m * m


def comb_projector(cate_proj_x, cont_proj_x, w, b, gamma, beta, *,
                   cate_num=1, cont_num=1, eps=1e-5, row_tile=1024,
                   force_pallas=False):
    """Forward pass of CombProjector.

    cate_proj_x: (B, S, cate_proj_dim) (ignored if cate_num == 0)
    cont_proj_x: (B, S, cont_proj_dim) (ignored if cont_num == 0)
    w: (D_in, H) = torch Linear.weight.T, b/gamma/beta: (H,)
    Returns (B, S, H).
    """
    xs = []
    if cate_num:
        xs.append(cate_proj_x)
    if cont_num:
        xs.append(cont_proj_x)
    if not xs:
        raise ValueError("at least one of cate_num / cont_num must be nonzero")

    B, S = xs[0].shape[0], xs[0].shape[1]
    H = w.shape[1]
    M = B * S
    out_dtype = xs[0].dtype

    # Tiny problems: the whole workload is smaller than a grid step's fixed
    # overhead -> let XLA fuse ReLU + matmul + LayerNorm instead.
    if not force_pallas and M * H < 65536:
        comb = xs[0] if len(xs) == 1 else jnp.concatenate(xs, axis=2)
        h = jnp.maximum(comb, 0.0) @ w + b
        mean = jnp.mean(h, axis=-1, keepdims=True)
        var = jnp.mean(jnp.square(h - mean), axis=-1, keepdims=True)
        out = (h - mean) * jax.lax.rsqrt(var + eps) * gamma + beta
        return out.astype(out_dtype)

    # ---- row tiling ---------------------------------------------------------
    # Per-step VMEM at tm=1024, D_in=32, H=32 f32 is ~0.25 MiB (x2 for double
    # buffering), far under the scoped defaults (16 MiB v5e, 32 MiB v6e/v7x;
    # v7x physical VMEM is 64 MiB, not 128 MiB).  No vmem_limit_bytes override
    # needed at these feature widths.
    tm = min(row_tile, _round_up(M, 8))
    # Keep >= 4 row tiles (>= 2 per TensorCore) on big problems so v7x's two
    # cores both get work and each still double-buffers.
    min_tiles = 4
    if M >= min_tiles * 256:
        tm = min(tm, _round_up(pl.cdiv(M, min_tiles), 8))
    grid = (pl.cdiv(M, tm),)   # partial last tile handled by Pallas masking

    def _rows(x):
        return x.reshape(M, x.shape[2])

    # Cheap per-call parameter prep (reshapes / static slices only).
    b2 = b.reshape(1, H)
    g2 = gamma.reshape(1, H)
    bt2 = beta.reshape(1, H)

    def x_spec(d):
        return pl.BlockSpec((tm, d), lambda i: (i, 0))

    def w_spec(d):
        return pl.BlockSpec((d, H), lambda i: (0, 0))   # VMEM-resident weights

    v_spec = pl.BlockSpec((1, H), lambda i: (0, 0))
    out_spec = pl.BlockSpec((tm, H), lambda i: (i, 0))  # (M, H): dense, unpadded
    compiler_params = pltpu.CompilerParams(
        dimension_semantics=("parallel",))  # independent row tiles (megacore)

    if len(xs) == 2:
        d1 = xs[0].shape[2]
        d2 = xs[1].shape[2]
        w1, w2 = w[:d1], w[d1:]
        out2d = pl.pallas_call(
            functools.partial(_comb_proj_kernel2, eps=eps),
            out_shape=jax.ShapeDtypeStruct((M, H), out_dtype),
            grid_spec=pltpu.PrefetchScalarGridSpec(
                num_scalar_prefetch=0,
                grid=grid,
                in_specs=[x_spec(d1), x_spec(d2),
                          w_spec(d1), w_spec(d2),
                          v_spec, v_spec, v_spec],
                out_specs=out_spec,
            ),
            compiler_params=compiler_params,
        )(_rows(xs[0]), _rows(xs[1]), w1, w2, b2, g2, bt2)
    else:
        d1 = xs[0].shape[2]
        out2d = pl.pallas_call(
            functools.partial(_comb_proj_kernel1, eps=eps),
            out_shape=jax.ShapeDtypeStruct((M, H), out_dtype),
            grid_spec=pltpu.PrefetchScalarGridSpec(
                num_scalar_prefetch=0,
                grid=grid,
                in_specs=[x_spec(d1), w_spec(d1), v_spec, v_spec, v_spec],
                out_specs=out_spec,
            ),
            compiler_params=compiler_params,
        )(_rows(xs[0]), w, b2, g2, bt2)

    return out2d.reshape(B, S, H)


def _reference(cate_proj_x, cont_proj_x, w, b, gamma, beta, eps=1e-5,
               cate_num=1, cont_num=1):
    if cate_num and cont_num:
        comb = jnp.concatenate([cate_proj_x, cont_proj_x], axis=2)
    elif cate_num:
        comb = cate_proj_x
    else:
        comb = cont_proj_x
    h = jnp.maximum(comb, 0.0) @ w + b
    mean = jnp.mean(h, axis=-1, keepdims=True)
    var = jnp.mean(jnp.square(h - mean), axis=-1, keepdims=True)
    return (h - mean) / jnp.sqrt(var + eps) * gamma + beta


if __name__ == "__main__":
    key = jax.random.PRNGKey(0)
    k1, k2, k3, k4 = jax.random.split(key, 4)

    # Small shapes consistent with the module: batch=2, seq=8,
    # cate_proj_dim=16, cont_proj_dim=16, hidden_dim=32.
    B, S = 2, 8
    cate_dim, cont_dim, hidden = 16, 16, 32
    D_in = cate_dim + cont_dim

    cate_x = jax.random.normal(k1, (B, S, cate_dim), dtype=jnp.float32)
    cont_x = jax.random.normal(k2, (B, S, cont_dim), dtype=jnp.float32)

    # Deterministic synthetic parameters (not a checkpoint).
    w = jax.random.normal(k3, (D_in, hidden), dtype=jnp.float32) * 0.05
    b = jax.random.normal(k4, (hidden,), dtype=jnp.float32) * 0.01
    gamma = jnp.ones((hidden,), dtype=jnp.float32)    # LayerNorm weight
    beta = jnp.zeros((hidden,), dtype=jnp.float32)    # LayerNorm bias

    out = comb_projector(cate_x, cont_x, w, b, gamma, beta,
                         cate_num=1, cont_num=1, force_pallas=True)
    out = jax.block_until_ready(out)
    ref = _reference(cate_x, cont_x, w, b, gamma, beta)
    assert out.shape == (B, S, hidden)
    assert jnp.allclose(out, ref, atol=1e-4, rtol=1e-4), "small-case mismatch"

    # Larger, tile-aligned case: multi-tile "parallel" grid, natural dispatch.
    B2, S2 = 4, 1024
    kk1, kk2 = jax.random.split(jax.random.PRNGKey(1), 2)
    cate_x2 = jax.random.normal(kk1, (B2, S2, cate_dim), dtype=jnp.float32)
    cont_x2 = jax.random.normal(kk2, (B2, S2, cont_dim), dtype=jnp.float32)
    out2 = comb_projector(cate_x2, cont_x2, w, b, gamma, beta,
                          cate_num=1, cont_num=1)
    out2 = jax.block_until_ready(out2)
    ref2 = _reference(cate_x2, cont_x2, w, b, gamma, beta)
    assert out2.shape == (B2, S2, hidden)
    assert jnp.allclose(out2, ref2, atol=1e-4, rtol=1e-4), "tiled-case mismatch"

    # Non-tile-aligned rows: exercises the partial last block (no wrapper
    # padding; Pallas masks the overhanging rows).
    B3, S3 = 3, 1000
    kk3, kk4 = jax.random.split(jax.random.PRNGKey(2), 2)
    cate_x3 = jax.random.normal(kk3, (B3, S3, cate_dim), dtype=jnp.float32)
    cont_x3 = jax.random.normal(kk4, (B3, S3, cont_dim), dtype=jnp.float32)
    out3 = comb_projector(cate_x3, cont_x3, w, b, gamma, beta,
                          cate_num=1, cont_num=1)
    out3 = jax.block_until_ready(out3)
    ref3 = _reference(cate_x3, cont_x3, w, b, gamma, beta)
    assert out3.shape == (B3, S3, hidden)
    assert jnp.allclose(out3, ref3, atol=1e-4, rtol=1e-4), "unaligned-case mismatch"

    print("KERNEL_OK")
</pallas_src>

<mosaic_0001>
module attributes {stable_mosaic.version = 11 : i64} {
  func.func @_comb_proj_kernel2(%arg0: i32, %arg1: memref<16x16xf32, #tpu.memory_space<vmem>>, %arg2: memref<16x16xf32, #tpu.memory_space<vmem>>, %arg3: memref<16x32xf32, #tpu.memory_space<vmem>>, %arg4: memref<16x32xf32, #tpu.memory_space<vmem>>, %arg5: memref<1x32xf32, #tpu.memory_space<vmem>>, %arg6: memref<1x32xf32, #tpu.memory_space<vmem>>, %arg7: memref<1x32xf32, #tpu.memory_space<vmem>>, %arg8: memref<16x32xf32, #tpu.memory_space<vmem>>) attributes {dimension_semantics = [#tpu.dimension_semantics<parallel>], iteration_bounds = array<i64: 1>, scalar_prefetch = 0 : i64, scratch_operands = 0 : i64, tpu.core_type = #tpu.core_type<tc>, window_params = [{transform_indices = @transform_0, window_bounds = array<i64: 16, 16>}, {transform_indices = @transform_1, window_bounds = array<i64: 16, 16>}, {pipeline_mode = #tpu.pipeline_mode<synchronous>, transform_indices = @transform_2, window_bounds = array<i64: 16, 32>}, {pipeline_mode = #tpu.pipeline_mode<synchronous>, transform_indices = @transform_3, window_bounds = array<i64: 16, 32>}, {pipeline_mode = #tpu.pipeline_mode<synchronous>, transform_indices = @transform_4, window_bounds = array<i64: 1, 32>}, {pipeline_mode = #tpu.pipeline_mode<synchronous>, transform_indices = @transform_5, window_bounds = array<i64: 1, 32>}, {pipeline_mode = #tpu.pipeline_mode<synchronous>, transform_indices = @transform_6, window_bounds = array<i64: 1, 32>}, {transform_indices = @transform_7, window_bounds = array<i64: 16, 32>}]} {
    %c0 = arith.constant 0 : index
    %c0_0 = arith.constant 0 : index
    %0 = vector.load %arg1[%c0, %c0_0] : memref<16x16xf32, #tpu.memory_space<vmem>>, vector<16x16xf32>
    %cst = arith.constant 0.000000e+00 : f32
    %1 = vector.broadcast %cst : f32 to vector<16x16xf32>
    %2 = arith.maximumf %0, %1 : vector<16x16xf32>
    %c0_1 = arith.constant 0 : index
    %c0_2 = arith.constant 0 : index
    %3 = vector.load %arg2[%c0_1, %c0_2] : memref<16x16xf32, #tpu.memory_space<vmem>>, vector<16x16xf32>
    %cst_3 = arith.constant 0.000000e+00 : f32
    %4 = vector.broadcast %cst_3 : f32 to vector<16x16xf32>
    %5 = arith.maximumf %3, %4 : vector<16x16xf32>
    %c0_4 = arith.constant 0 : index
    %c0_5 = arith.constant 0 : index
    %6 = vector.load %arg3[%c0_4, %c0_5] : memref<16x32xf32, #tpu.memory_space<vmem>>, vector<16x32xf32>
    %cst_6 = arith.constant dense<0.000000e+00> : vector<16x32xf32>
    %7 = tpu.matmul %2, %6, %cst_6 {dimension_numbers = #tpu.dot_dimension_numbers<[1], [0], [0], [1], [0, 0, 1, 1], [], []>} : vector<16x16xf32>, vector<16x32xf32>, vector<16x32xf32> -> vector<16x32xf32>
    %c0_7 = arith.constant 0 : index
    %c0_8 = arith.constant 0 : index
    %8 = vector.load %arg4[%c0_7, %c0_8] : memref<16x32xf32, #tpu.memory_space<vmem>>, vector<16x32xf32>
    %cst_9 = arith.constant dense<0.000000e+00> : vector<16x32xf32>
    %9 = tpu.matmul %5, %8, %cst_9 {dimension_numbers = #tpu.dot_dimension_numbers<[1], [0], [0], [1], [0, 0, 1, 1], [], []>} : vector<16x16xf32>, vector<16x32xf32>, vector<16x32xf32> -> vector<16x32xf32>
    %10 = arith.addf %7, %9 : vector<16x32xf32>
    %c0_10 = arith.constant 0 : index
    %c0_11 = arith.constant 0 : index
    %11 = vector.load %arg5[%c0_10, %c0_11] : memref<1x32xf32, #tpu.memory_space<vmem>>, vector<1x32xf32>
    %12 = vector.broadcast %11 : vector<1x32xf32> to vector<16x32xf32>
    %13 = arith.addf %10, %12 : vector<16x32xf32>
    %cst_12 = arith.constant dense<0.000000e+00> : vector<16xf32>
    %14 = vector.multi_reduction <add>, %13, %cst_12 [1] : vector<16x32xf32> to vector<16xf32>
    %15 = vector.shape_cast %14 : vector<16xf32> to vector<16x1xf32>
    %cst_13 = arith.constant 3.200000e+01 : f32
    %16 = vector.broadcast %cst_13 : f32 to vector<16x1xf32>
    %17 = arith.divf %15, %16 : vector<16x1xf32>
    %18 = vector.broadcast %17 : vector<16x1xf32> to vector<16x32xf32>
    %19 = arith.subf %13, %18 : vector<16x32xf32>
    %20 = arith.mulf %19, %19 : vector<16x32xf32>
    %cst_14 = arith.constant dense<0.000000e+00> : vector<16xf32>
    %21 = vector.multi_reduction <add>, %20, %cst_14 [1] : vector<16x32xf32> to vector<16xf32>
    %22 = vector.shape_cast %21 : vector<16xf32> to vector<16x1xf32>
    %cst_15 = arith.constant 3.200000e+01 : f32
    %23 = vector.broadcast %cst_15 : f32 to vector<16x1xf32>
    %24 = arith.divf %22, %23 : vector<16x1xf32>
    %cst_16 = arith.constant 9.99999974E-6 : f32
    %25 = vector.broadcast %cst_16 : f32 to vector<16x1xf32>
    %26 = arith.addf %24, %25 : vector<16x1xf32>
    %27 = math.rsqrt %26 : vector<16x1xf32>
    %28 = vector.broadcast %27 : vector<16x1xf32> to vector<16x32xf32>
    %29 = arith.mulf %19, %28 : vector<16x32xf32>
    %c0_17 = arith.constant 0 : index
    %c0_18 = arith.constant 0 : index
    %30 = vector.load %arg6[%c0_17, %c0_18] : memref<1x32xf32, #tpu.memory_space<vmem>>, vector<1x32xf32>
    %31 = vector.broadcast %30 : vector<1x32xf32> to vector<16x32xf32>
    %32 = arith.mulf %29, %31 : vector<16x32xf32>
    %c0_19 = arith.constant 0 : index
    %c0_20 = arith.constant 0 : index
    %33 = vector.load %arg7[%c0_19, %c0_20] : memref<1x32xf32, #tpu.memory_space<vmem>>, vector<1x32xf32>
    %34 = vector.broadcast %33 : vector<1x32xf32> to vector<16x32xf32>
    %35 = arith.addf %32, %34 : vector<16x32xf32>
    %c0_21 = arith.constant 0 : index
    %c0_22 = arith.constant 0 : index
    %36 = vector.load %arg8[%c0_21, %c0_22] : memref<16x32xf32, #tpu.memory_space<vmem>>, vector<16x32xf32>
    tpu.vector_store %arg8[%c0_21, %c0_22], %35 {strides = array<i32>} : memref<16x32xf32, #tpu.memory_space<vmem>>, vector<16x32xf32>,
    return
  }
  func.func @transform_0(%arg0: i32) -> (i32, i32) {
    %c0_i32 = arith.constant 0 : i32
    %c0_i32_0 = arith.constant 0 : i32
    return %arg0, %c0_i32 : i32, i32
  }
  func.func @transform_1(%arg0: i32) -> (i32, i32) {
    %c0_i32 = arith.constant 0 : i32
    %c0_i32_0 = arith.constant 0 : i32
    return %arg0, %c0_i32 : i32, i32
  }
  func.func @transform_2(%arg0: i32) -> (i32, i32) {
    %c0_i32 = arith.constant 0 : i32
    %c0_i32_0 = arith.constant 0 : i32
    %c0_i32_1 = arith.constant 0 : i32
    return %c0_i32, %c0_i32_0 : i32, i32
  }
  func.func @transform_3(%arg0: i32) -> (i32, i32) {
    %c0_i32 = arith.constant 0 : i32
    %c0_i32_0 = arith.constant 0 : i32
    %c0_i32_1 = arith.constant 0 : i32
    return %c0_i32, %c0_i32_0 : i32, i32
  }
  func.func @transform_4(%arg0: i32) -> (i32, i32) {
    %c0_i32 = arith.constant 0 : i32
    %c0_i32_0 = arith.constant 0 : i32
    %c0_i32_1 = arith.constant 0 : i32
    return %c0_i32, %c0_i32_0 : i32, i32
  }
  func.func @transform_5(%arg0: i32) -> (i32, i32) {
    %c0_i32 = arith.constant 0 : i32
    %c0_i32_0 = arith.constant 0 : i32
    %c0_i32_1 = arith.constant 0 : i32
    return %c0_i32, %c0_i32_0 : i32, i32
  }
  func.func @transform_6(%arg0: i32) -> (i32, i32) {
    %c0_i32 = arith.constant 0 : i32
    %c0_i32_0 = arith.constant 0 : i32
    %c0_i32_1 = arith.constant 0 : i32
    return %c0_i32, %c0_i32_0 : i32, i32
  }
  func.func @transform_7(%arg0: i32) -> (i32, i32) {
    %c0_i32 = arith.constant 0 : i32
    %c0_i32_0 = arith.constant 0 : i32
    return %arg0, %c0_i32 : i32, i32
  }
}

</mosaic_0001>

<llo_original>
// kernel: tpu_custom_call.1
$region0: #{tpu_custom_call.1}
  #allocation0 [shape = 'u32[]', space=smem, size = 0x4, offset = 0x4, fixed_abs, tag = 'smem constant byte address 0x4 - core index']
  #allocation1 [shape = 'u32[72,128]{1,0:T(1,128)}', space=vmem, size = 0x9000, scoped, tag = 'internal scratch']
  %s0 = inlined_call_operand.hbm [shape: f32[16,16], index: 0, kind: input, shape index: {}]
  %s1 = inlined_call_operand.hbm [shape: f32[16,16], index: 1, kind: input, shape index: {}]
  %s2 = inlined_call_operand.hbm [shape: f32[16,32], index: 2, kind: input, shape index: {}]
  %s3 = inlined_call_operand.hbm [shape: f32[16,32], index: 3, kind: input, shape index: {}]
  %s4 = inlined_call_operand.vmem [shape: f32[1,32], index: 4, kind: input, shape index: {}]
  %s5 = inlined_call_operand.vmem [shape: f32[1,32], index: 5, kind: input, shape index: {}]
  %s6 = inlined_call_operand.vmem [shape: f32[1,32], index: 6, kind: input, shape index: {}]
  %s7 = inlined_call_operand.hbm [shape: f32[16,32], index: 7, kind: output, shape index: {}]
  %s8 = sld [smem:[#allocation0]]
  $region54: #{tpu_custom_call.1} parent=0
    _
  %s10 = ssub.s32 1, %s8
  %s11 = scalar_select 0, %s10, %s8
  $region1: #{tpu_custom_call.1} parent=0
    #allocation2 [shape = 'u8[8192]{0}', space=vmem, size = 0x2000, scoped, tag = 'input window, operand 0, single buffered']
    #allocation3 [shape = 's32[1]{0}', space=sflag, size = 0x4, scoped, tag = 'scoped memory for tpu_custom_call.1']
    #allocation4 [shape = 's32[1]{0}', space=sflag, size = 0x4, scoped, tag = 'scoped memory for tpu_custom_call.1']
    #allocation5 [shape = 'u8[8192]{0}', space=vmem, size = 0x2000, scoped, tag = 'input window, operand 1, single buffered']
    #allocation6 [shape = 's32[1]{0}', space=sflag, size = 0x4, scoped, tag = 'scoped memory for tpu_custom_call.1']
    #allocation7 [shape = 'u8[8192]{0}', space=vmem, size = 0x2000, scoped, tag = 'input window, operand 2, single buffered']
    #allocation8 [shape = 'u8[8192]{0}', space=vmem, size = 0x2000, scoped, tag = 'input window, operand 3, single buffered']
    #allocation9 [shape = 's32[1]{0}', space=sflag, size = 0x4, scoped, tag = 'scoped memory for tpu_custom_call.1']
    #allocation10 [shape = 'u8[8192]{0}', space=vmem, size = 0x2000, scoped, tag = 'output window, operand 0, single buffered']
    %12 = vsyncpa [#allocation3], 0
    %13 = vsyncpa [#allocation6], 0
    %14 = vsyncpa [#allocation9], 0
    %15 = vsyncpa [#allocation4], 0
    // Predicated region
    $region2: #{tpu_custom_call.1} parent=1 // pred_check
      _
    $region3: #{tpu_custom_call.1} parent=1 // pred_check_branch
      %17 = sbr.rel (0) target = $region5
    $region4: #{tpu_custom_call.1} parent=1 // pred_region
      %19 = vsyncadd [#allocation3], 0
      %s20 = sshll.u32 %s0, 4
      %s21 = int_to_ptr.hbm [resolvable:$true] %s20
      %s22 = sshll.u32 [#allocation2], 4
      %s23 = int_to_ptr.vmem [resolvable:$true] %s22
      %28 = dma.hbm_to_vmem [thread:$0]  %s21, 256, %s23, [#allocation3], 128, 128, 8
    $region5: #{tpu_custom_call.1} parent=1 // pred_fallthru
      _
    // Predicated region
    $region6: #{tpu_custom_call.1} parent=1 // pred_check
      _
    $region7: #{tpu_custom_call.1} parent=1 // pred_check_branch
      %30 = sbr.rel (0) target = $region9
    $region8: #{tpu_custom_call.1} parent=1 // pred_region
      %32 = vsyncadd [#allocation6], 0
      %s33 = sshll.u32 %s1, 4
      %s34 = int_to_ptr.hbm [resolvable:$true] %s33
      %s35 = sshll.u32 [#allocation5], 4
      %s36 = int_to_ptr.vmem [resolvable:$true] %s35
      %41 = dma.hbm_to_vmem [thread:$0]  %s34, 256, %s36, [#allocation6], 128, 128, 8
    $region9: #{tpu_custom_call.1} parent=1 // pred_fallthru
      _
    // Predicated region
    $region10: #{tpu_custom_call.1} parent=1 // pred_check
      _
    $region11: #{tpu_custom_call.1} parent=1 // pred_check_branch
      %43 = sbr.rel (0) target = $region13
    $region12: #{tpu_custom_call.1} parent=1 // pred_region
      %45 = vsyncadd [#allocation6], 0
      %s46 = sshll.u32 %s2, 4
      %s47 = int_to_ptr.hbm [resolvable:$true] %s46
      %s48 = sshll.u32 [#allocation7], 4
      %s49 = int_to_ptr.vmem [resolvable:$true] %s48
      %54 = dma.hbm_to_vmem [thread:$0]  %s47, 256, %s49, [#allocation6], 128, 128, 8
    $region13: #{tpu_custom_call.1} parent=1 // pred_fallthru
      _
    // Predicated region
    $region14: #{tpu_custom_call.1} parent=1 // pred_check
      _
    $region15: #{tpu_custom_call.1} parent=1 // pred_check_branch
      %56 = sbr.rel (0) target = $region17
    $region16: #{tpu_custom_call.1} parent=1 // pred_region
      %58 = vsyncadd [#allocation9], 0
      %s59 = sshll.u32 %s3, 4
      %s60 = int_to_ptr.hbm [resolvable:$true] %s59
      %s61 = sshll.u32 [#allocation8], 4
      %s62 = int_to_ptr.vmem [resolvable:$true] %s61
      %67 = dma.hbm_to_vmem [thread:$0]  %s60, 256, %s62, [#allocation9], 128, 128, 8
    $region17: #{tpu_custom_call.1} parent=1 // pred_fallthru
      _
    // Predicated region
    $region18: #{tpu_custom_call.1} parent=1 // pred_check
      _
    $region19: #{tpu_custom_call.1} parent=1 // pred_check_branch
      %69 = sbr.rel (0) target = $region21
    $region20: #{tpu_custom_call.1} parent=1 // pred_region
      _
    $region21: #{tpu_custom_call.1} parent=1 // pred_fallthru
      _
    // Predicated region
    $region22: #{tpu_custom_call.1} parent=1 // pred_check
      _
    $region23: #{tpu_custom_call.1} parent=1 // pred_check_branch
      %71 = sbr.rel (0) target = $region25
    $region24: #{tpu_custom_call.1} parent=1 // pred_region
      _
    $region25: #{tpu_custom_call.1} parent=1 // pred_fallthru
      _
    // Predicated region
    $region26: #{tpu_custom_call.1} parent=1 // pred_check
      _
    $region27: #{tpu_custom_call.1} parent=1 // pred_check_branch
      %73 = sbr.rel (0) target = $region29
    $region28: #{tpu_custom_call.1} parent=1 // pred_region
      _
    $region29: #{tpu_custom_call.1} parent=1 // pred_fallthru
      _
    // Predicated region
    $region30: #{tpu_custom_call.1} parent=1 // pred_check
      _
    $region31: #{tpu_custom_call.1} parent=1 // pred_check_branch
      %75 = sbr.rel (0) target = $region33
    $region32: #{tpu_custom_call.1} parent=1 // pred_region
      %77 = dma.done [#allocation3], 256
    $region33: #{tpu_custom_call.1} parent=1 // pred_fallthru
      _
    // Predicated region
    $region34: #{tpu_custom_call.1} parent=1 // pred_check
      _
    $region35: #{tpu_custom_call.1} parent=1 // pred_check_branch
      %79 = sbr.rel (0) target = $region37
    $region36: #{tpu_custom_call.1} parent=1 // pred_region
      %81 = dma.done [#allocation6], 256
    $region37: #{tpu_custom_call.1} parent=1 // pred_fallthru
      _
    // Predicated region
    $region38: #{tpu_custom_call.1} parent=1 // pred_check
      _
    $region39: #{tpu_custom_call.1} parent=1 // pred_check_branch
      %83 = sbr.rel (0) target = $region41
    $region40: #{tpu_custom_call.1} parent=1 // pred_region
      %85 = dma.done [#allocation6], 256
    $region41: #{tpu_custom_call.1} parent=1 // pred_fallthru
      _
    // Predicated region
    $region42: #{tpu_custom_call.1} parent=1 // pred_check
      _
    $region43: #{tpu_custom_call.1} parent=1 // pred_check_branch
      %87 = sbr.rel (0) target = $region45
    $region44: #{tpu_custom_call.1} parent=1 // pred_region
      %89 = dma.done [#allocation9], 256
    $region45: #{tpu_custom_call.1} parent=1 // pred_fallthru
      _
    %v90 = vld [vmem:[#allocation2] sm:$0xff]
    %v91 = vld [vmem:[#allocation2 + $0x8] sm:$0xff]
    %v92 = vmax.f32 %v90, 0.0
    %v93 = vmax.f32 %v91, 0.0
    %v94 = vld [vmem:[#allocation5] sm:$0xff]
    %v95 = vld [vmem:[#allocation5 + $0x8] sm:$0xff]
    %v96 = vmax.f32 %v94, 0.0
    %v97 = vmax.f32 %v95, 0.0
    %v98 = vld [vmem:[#allocation7] sm:$0xff]
    %v99 = vld [vmem:[#allocation7 + $0x8] sm:$0xff]
    %v100 = vld [vmem:[#allocation8] sm:$0xff]
    %v101 = vld [vmem:[#allocation8 + $0x8] sm:$0xff]
    %vm102 = vcmask 130048
    %v104 = vsel %vm102, %v96, 0
    %v107 = vsel %vm102, %v97, 0
    %109 = vmatpush.msra.mxu0 0.0
    %110 = vmatpush.msra.mxu0 0.0
    %111 = vmatpush.msra.mxu0 0.0
    %112 = vmatpush.msra.mxu0 0.0
    %113 = vmatpush.msra.mxu0 0.0
    %114 = vmatpush.msra.mxu0 0.0
    %115 = vmatpush.msra.mxu0 0.0
    %116 = vmatpush.msra.mxu0 0.0
    %117 = vmatpush.msra.mxu0 0.0
    %118 = vmatpush.msra.mxu0 0.0
    %119 = vmatpush.msra.mxu0 0.0
    %120 = vmatpush.msra.mxu0 0.0
    %121 = vmatpush.msra.mxu0 0.0
    %122 = vmatpush.msra.mxu0 0.0
    %123 = vmatpush.msra.mxu0 %v101
    %124 = vmatpush.msra.mxu0 %v100
    %125 = vmatmul.f32.gmra.mxu0 %v104
    %v126 = vpop.f32.mrf.mxu0
    %v127 = vadd.f32 0.0, %v126
    %128 = vmatmul.f32.gmra.mxu0 %v107
    %v129 = vpop.f32.mrf.mxu0
    %v130 = vadd.f32 0.0, %v129
    %131 = vdwg.mxu0
    %v133 = vsel %vm102, %v92, 0
    %v136 = vsel %vm102, %v93, 0
    %138 = vmatpush.msra.mxu0 0.0
    %139 = vmatpush.msra.mxu0 0.0
    %140 = vmatpush.msra.mxu0 0.0
    %141 = vmatpush.msra.mxu0 0.0
    %142 = vmatpush.msra.mxu0 0.0
    %143 = vmatpush.msra.mxu0 0.0
    %144 = vmatpush.msra.mxu0 0.0
    %145 = vmatpush.msra.mxu0 0.0
    %146 = vmatpush.msra.mxu0 0.0
    %147 = vmatpush.msra.mxu0 0.0
    %148 = vmatpush.msra.mxu0 0.0
    %149 = vmatpush.msra.mxu0 0.0
    %150 = vmatpush.msra.mxu0 0.0
    %151 = vmatpush.msra.mxu0 0.0
    %152 = vmatpush.msra.mxu0 %v99
    %153 = vmatpush.msra.mxu0 %v98
    %154 = vmatmul.f32.gmra.mxu0 %v133
    %v155 = vpop.f32.mrf.mxu0
    %v156 = vadd.f32 %v127, %v155
    %157 = vmatmul.f32.gmra.mxu0 %v136
    %v158 = vpop.f32.mrf.mxu0
    %v159 = vadd.f32 %v130, %v158
    %160 = vdwg.mxu0
    %v161 = vld [vmem:[%s4] sm:$0x1]
    %v163 = vperm.slane %v161, 0
    %v165 = vadd.f32 %v156, %v163
    %v166 = vadd.f32 %v159, %v163
    %vm167 = vcmask 261120
    %v168 = vsel %vm167, %v165, 0.0
    %169 = vadd.xlane.f32.xlu0 %v168
    %v170 = vpop.xlane.xlu0 %169
    %v171 = vsel %vm167, %v166, 0.0
    %172 = vadd.xlane.f32.xlu0 %v171
    %v173 = vpop.xlane.xlu0 %172
    %v174 = vrcp.pop 32.0
    %v175 = vmul.f32 32.0, %v174
    %v176 = vsub.f32 1.0, %v175
    %v177 = vmul.f32 %v174, %v176
    %v178 = vadd.f32 %v174, %v177
    %vm179 = vweird.f32 %v174
    %v180 = vsel %vm179, %v174, %v178
    %v181 = vmul.f32 %v170, %v180
    %v182 = vmul.f32 %v173, %v180
    %v183 = vsub.f32 %v165, %v181
    %v184 = vsub.f32 %v166, %v182
    %v185 = vmul.f32 %v183, %v183
    %v186 = vmul.f32 %v184, %v184
    %v187 = vsel %vm167, %v185, 0.0
    %188 = vadd.xlane.f32.xlu0 %v187
    %v189 = vpop.xlane.xlu0 %188
    %v190 = vsel %vm167, %v186, 0.0
    %191 = vadd.xlane.f32.xlu0 %v190
    %v192 = vpop.xlane.xlu0 %191
    %v193 = vmul.f32 %v189, %v180
    %v194 = vmul.f32 %v192, %v180
    %v195 = vadd.f32 %v193, 1e-05
    %v196 = vadd.f32 %v194, 1e-05
    %v197 = vrsqrt.pop %v195
    %v198 = vmul.f32 %v197, %v195
    %v199 = vmul.f32 %v198, %v197
    %v200 = vmul.f32 0.5, %v199
    %v201 = vsub.f32 1.5, %v200
    %v202 = vmul.f32 %v197, %v201
    %vm203 = vweird.f32 %v195
    %vm204 = vweird.f32 %v197
    %vm205 = vmor %vm203, %vm204
    %v206 = vsel %vm205, %v197, %v202
    %v207 = vrsqrt.pop %v196
    %v208 = vmul.f32 %v207, %v196
    %v209 = vmul.f32 %v208, %v207
    %v210 = vmul.f32 0.5, %v209
    %v211 = vsub.f32 1.5, %v210
    %v212 = vmul.f32 %v207, %v211
    %vm213 = vweird.f32 %v196
    %vm214 = vweird.f32 %v207
    %vm215 = vmor %vm213, %vm214
    %v216 = vsel %vm215, %v207, %v212
    %v217 = vmul.f32 %v183, %v206
    %v218 = vmul.f32 %v184, %v216
    %v219 = vld [vmem:[%s5] sm:$0x1]
    %v221 = vperm.slane %v219, 0
    %v223 = vmul.f32 %v217, %v221
    %v224 = vmul.f32 %v218, %v221
    %v225 = vld [vmem:[%s6] sm:$0x1]
    %v227 = vperm.slane %v225, 0
    %v229 = vadd.f32 %v223, %v227
    %v230 = vadd.f32 %v224, %v227
    %231 = vst.msk [vmem:[#allocation10] sm:$0xff] %vm167, %v229
    %232 = vst.msk [vmem:[#allocation10 + $0x8] sm:$0xff] %vm167, %v230
    // Predicated region
    $region46: #{tpu_custom_call.1} parent=1 // pred_check
      _
    $region47: #{tpu_custom_call.1} parent=1 // pred_check_branch
      %234 = sbr.rel (0) target = $region49
    $region48: #{tpu_custom_call.1} parent=1 // pred_region
      %236 = vsyncadd [#allocation4], 0
      %s237 = sshll.u32 [#allocation10], 4
      %s238 = int_to_ptr.vmem [resolvable:$true] %s237
      %s239 = sshll.u32 %s7, 4
      %s240 = int_to_ptr.hbm [resolvable:$true] %s239
      %245 = dma.vmem_to_hbm [thread:$0]  %s238, 256, %s240, [#allocation4], 128, 128, 8
    $region49: #{tpu_custom_call.1} parent=1 // pred_fallthru
      _
    // Predicated region
    $region50: #{tpu_custom_call.1} parent=1 // pred_check
      _
    $region51: #{tpu_custom_call.1} parent=1 // pred_check_branch
      %247 = sbr.rel (0) target = $region53
    $region52: #{tpu_custom_call.1} parent=1 // pred_region
      %249 = dma.done [#allocation4], 256
    $region53: #{tpu_custom_call.1} parent=1 // pred_fallthru
      _
    %250 = vsyncpa [#allocation3], 1
    %251 = vsyncpa [#allocation6], 1
    %252 = vsyncpa [#allocation9], 1
    %253 = vsyncpa [#allocation4], 1

</llo_original>
